<compile_context>
chip_gen: v7x
topology: tpu7x:2x2x1
jax: 0.10.0
libtpu: 0.0.40
codegen_flags: <defaults>
</compile_context>

<pallas_src>
import functools

import numpy as np

import jax
import jax.numpy as jnp
from jax.experimental import pallas as pl
from jax.experimental.pallas import tpu as pltpu


def _round_up(x, m):
    return ((x + m - 1) // m) * m


def _vmem_params():
    """Per-generation VMEM working-set budget / scoped-limit / min grid steps."""
    cap = 64 * 1024 * 1024
    try:
        cap = pltpu.get_tpu_info().vmem_capacity_bytes
    except Exception:
        pass
    if cap >= 96 * 1024 * 1024:
        # v5e / v6e: 128 MiB physical VMEM -> big tiles; >=4 steps to pipeline.
        return dict(budget=56 << 20, limit_floor=64 << 20,
                    limit_cap=112 << 20, min_steps=4)
    # v7x-class: 64 MiB physical (32 MiB default scoped), 2 TensorCores ->
    # smaller tiles but enough grid steps for 2-TC occupancy + pipelining.
    return dict(budget=20 << 20, limit_floor=32 << 20,
                limit_cap=52 << 20, min_steps=12)


def _choose_c_block(C, HW, KK, itemsize, margin, budget_bytes, n_batch,
                    min_steps):
    """Largest legal channel tile under the VMEM budget (fast path).

    Legal: divides C and is a multiple of 8, or equals C (full dim).
    Among the tiles that fit the budget, prefer the largest one that still
    yields >= min_steps total grid steps (v7x 2-TC sharding + pipelining).
    Returns (c_blk, working_set_bytes).
    """
    per_c = itemsize * (2 * HW              # input block, double buffered
                        + 2 * KK * HW       # output block, double buffered
                        + (HW + 2 * margin))  # flat padded scratch (single)
    cands = sorted({d for d in range(8, C + 1, 8) if C % d == 0} | {C})
    fit = [d for d in cands if d * per_c <= budget_bytes]
    if not fit:
        # No legal tile fits the budget: take the smallest legal one and let
        # the caller raise vmem_limit_bytes accordingly (clamped).
        fit = [cands[0]]
    enough = [d for d in fit if n_batch * (C // d) >= min_steps]
    c_blk = max(enough) if enough else max(fit)
    return c_blk, c_blk * per_c


# ---------------------------------------------------------------------------
# Fast path: stride == 1 and 2*padding == K-1  (CTPN config; out_h==H, out_w==W)
# ---------------------------------------------------------------------------
def _im2col_flat_kernel(x_ref, mask_ref, o_ref, buf_ref, *, K, pad, W, HW,
                        margin):
    # x_ref   : (c_blk, HW)            flattened input tile (row-major H*W)
    # mask_ref: (K*K, HW) int32        static column-validity mask (1 = valid)
    # o_ref   : (c_blk, K*K*HW)        dense output tile (tap-major in lanes)
    # buf_ref : (c_blk, HW + 2*margin) VMEM scratch: [zeros | image | zeros]
    c_blk = x_ref.shape[0]
    zeros = jnp.zeros((c_blk, margin), x_ref.dtype)
    # Every-step zeroing is intentional: scratch persists per core, and with
    # both grid axes "parallel" a program_id==0 guard would leave the second
    # v7x TensorCore's margins uninitialized.
    buf_ref[:, :margin] = zeros                               # rows above image
    buf_ref[:, margin + HW:margin + 2 * HW if False else margin + HW + margin] = zeros
    buf_ref[:, margin:margin + HW] = x_ref[...]               # aligned dense copy

    for ki in range(K):
        for kj in range(K):
            kk = ki * K + kj
            # Constant flat shift: out[h*W + w] = x[(h+ki-pad)*W + (w+kj-pad)].
            start = margin + (ki - pad) * W + (kj - pad)      # static offset
            win = buf_ref[:, start:start + HW]                # lane-offset load
            # Zero margins handle rows outside the image; the column mask
            # kills the horizontal wrap-around of the flat layout.  jnp.where
            # (not multiply) so out-of-bounds taps are exact zeros.
            tap = jnp.where(mask_ref[kk:kk + 1, :] != 0, win,
                            jnp.zeros_like(win))
            # Sublane-dense (c_blk rows), lane-wide (HW) store at a static
            # lane offset: no single-sublane masked stores, no 9->16 padding.
            o_ref[:, kk * HW:(kk + 1) * HW] = tap


def _im2col_fast(x, K, padding):
    N, C, H, W = x.shape
    HW = H * W
    margin = max(128, _round_up(padding * (W + 1), 128))      # 128-aligned pad zone
    params = _vmem_params()
    c_blk, working_set = _choose_c_block(
        C, HW, K * K, x.dtype.itemsize, margin, params["budget"], N,
        params["min_steps"])
    vmem_limit = min(params["limit_cap"],
                     max(params["limit_floor"], working_set + (8 << 20)))

    # Static column-validity mask: tap (ki,kj) is valid at column w iff
    # 0 <= w + kj - padding < W (row validity is handled by the zero margins).
    w_idx = np.arange(W)
    mask_np = np.zeros((K * K, HW), dtype=np.int32)
    for ki in range(K):
        for kj in range(K):
            ok = (w_idx + kj - padding >= 0) & (w_idx + kj - padding < W)
            mask_np[ki * K + kj] = np.tile(ok.astype(np.int32), H)
    mask = jnp.asarray(mask_np)

    xf = x.reshape(N, C, HW)   # flatten spatial dims once (input-sized, cheap)

    kernel = functools.partial(
        _im2col_flat_kernel, K=K, pad=padding, W=W, HW=HW, margin=margin)

    col = pl.pallas_call(
        kernel,
        out_shape=jax.ShapeDtypeStruct((N, C, K * K * HW), x.dtype),
        grid=(N, C // c_blk),
        in_specs=[
            pl.BlockSpec((pl.Squeezed(), c_blk, HW), lambda n, cb: (n, cb, 0)),
            pl.BlockSpec((K * K, HW), lambda n, cb: (0, 0)),
        ],
        out_specs=pl.BlockSpec(
            (pl.Squeezed(), c_blk, K * K * HW), lambda n, cb: (n, cb, 0)),
        scratch_shapes=[pltpu.VMEM((c_blk, HW + 2 * margin), x.dtype)],
        compiler_params=pltpu.CompilerParams(
            dimension_semantics=("parallel", "parallel"),
            vmem_limit_bytes=vmem_limit,
        ),
    )(xf, mask)

    # (N, C, K*K*HW) -> (N, C*K*K, HW): contiguous, so both splits are free.
    unf = col.reshape(N, C * K * K, HW)
    # Module semantics: (N, C*K*K, H, -1).  For this config out_h == H, so the
    # trailing reshape just splits L back into (H, W).
    return unf.reshape(N, C * K * K, H, -1)


# ---------------------------------------------------------------------------
# General fallback (arbitrary kernel_size / stride / padding)
# ---------------------------------------------------------------------------
def _im2col_general_kernel(xp_ref, o_ref, *, K, stride, out_h, out_w):
    # xp_ref: (c_blk, Hp, Wp) zero-padded input tile.
    # o_ref : (c_blk, K*K, out_h, out_w)
    for ki in range(K):
        for kj in range(K):
            if stride == 1:
                win = xp_ref[:, ki:ki + out_h, kj:kj + out_w]
            else:
                # TODO(synk): lane-strided slicing may lower poorly on Mosaic;
                # CTPN always uses stride=1 (handled by the fast path above).
                win = jax.lax.slice(
                    xp_ref[...], (0, ki, kj),
                    (xp_ref.shape[0], ki + (out_h - 1) * stride + 1,
                     kj + (out_w - 1) * stride + 1),
                    (1, stride, stride))
            o_ref[:, ki * K + kj] = win


def _im2col_general(x, K, stride, padding):
    N, C, H, W = x.shape
    # TODO(synk): fold the padding into the kernel (as the fast path does) to
    # avoid this extra HBM pass over the input.
    xp = jnp.pad(x, ((0, 0), (0, 0), (padding, padding), (padding, padding)))
    Hp, Wp = H + 2 * padding, W + 2 * padding
    out_h = (Hp - K) // stride + 1
    out_w = (Wp - K) // stride + 1
    params = _vmem_params()

    # Channel tiling (any divisor of C is legal: last-two block dims are the
    # full spatial extents).
    itemsize = x.dtype.itemsize
    per_c = itemsize * (2 * Hp * Wp + 2 * K * K * out_h * out_w)
    cands = [d for d in range(1, C + 1) if C % d == 0]
    fit = [d for d in cands if d * per_c <= params["budget"]] or [1]
    enough = [d for d in fit if N * (C // d) >= params["min_steps"]]
    c_blk = max(enough) if enough else max(fit)
    working_set = c_blk * per_c
    vmem_limit = min(params["limit_cap"],
                     max(params["limit_floor"], working_set + (8 << 20)))

    kernel = functools.partial(
        _im2col_general_kernel, K=K, stride=stride, out_h=out_h, out_w=out_w)

    col = pl.pallas_call(
        kernel,
        out_shape=jax.ShapeDtypeStruct((N, C, K * K, out_h, out_w), x.dtype),
        grid=(N, C // c_blk),
        in_specs=[pl.BlockSpec((pl.Squeezed(), c_blk, Hp, Wp),
                               lambda n, cb: (n, cb, 0, 0))],
        out_specs=pl.BlockSpec(
            (pl.Squeezed(), c_blk, K * K, out_h, out_w),
            lambda n, cb: (n, cb, 0, 0, 0)),
        compiler_params=pltpu.CompilerParams(
            dimension_semantics=("parallel", "parallel"),
            vmem_limit_bytes=vmem_limit,
        ),
    )(xp)

    unf = col.reshape(N, C * K * K, out_h * out_w)
    return unf.reshape(N, C * K * K, H, -1)


def im2col(x, kernel_size, stride, padding):
    """Pallas equivalent of the Im2Col module's forward."""
    N, C, H, W = x.shape
    K = kernel_size
    out_h = (H + 2 * padding - K) // stride + 1
    out_w = (W + 2 * padding - K) // stride + 1
    if (out_h * out_w) % H != 0:
        # Same implicit constraint the torch module's reshape enforces.
        raise ValueError(
            f"unfold length {out_h * out_w} not divisible by height {H}")
    if stride == 1 and 2 * padding == K - 1:
        return _im2col_fast(x, K, padding)
    return _im2col_general(x, K, stride, padding)


def _unfold_ref(x, K, stride, padding):
    """Pure-JAX reference matching torch F.unfold + the module reshape."""
    N, C, H, W = x.shape
    xp = jnp.pad(x, ((0, 0), (0, 0), (padding, padding), (padding, padding)))
    out_h = (H + 2 * padding - K) // stride + 1
    out_w = (W + 2 * padding - K) // stride + 1
    cols = []
    for ki in range(K):
        for kj in range(K):
            cols.append(
                xp[:, :,
                   ki:ki + (out_h - 1) * stride + 1:stride,
                   kj:kj + (out_w - 1) * stride + 1:stride])
    col = jnp.stack(cols, axis=2)  # (N, C, K*K, out_h, out_w)
    unf = col.reshape(N, C * K * K, out_h * out_w)
    return unf.reshape(N, C * K * K, H, -1)


if __name__ == "__main__":
    # Im2Col has no learned parameters; CTPN uses (3, 1, 1).
    kernel_size, stride, padding = 3, 1, 1

    key = jax.random.PRNGKey(0)
    x = jax.random.normal(key, (2, 4, 16, 16), dtype=jnp.float32)

    out = im2col(x, kernel_size, stride, padding)
    out = jax.block_until_ready(out)

    ref = _unfold_ref(x, kernel_size, stride, padding)
    assert out.shape == ref.shape, (out.shape, ref.shape)
    assert jnp.allclose(out, ref), "Pallas im2col mismatch vs reference"

    print("KERNEL_OK")
</pallas_src>

<mosaic_0001>
module attributes {stable_mosaic.version = 11 : i64} {
  func.func @_im2col_flat_kernel(%arg0: i32, %arg1: i32, %arg2: memref<1x4x256xf32, #tpu.memory_space<vmem>>, %arg3: memref<9x256xi32, #tpu.memory_space<vmem>>, %arg4: memref<1x4x2304xf32, #tpu.memory_space<vmem>>, %arg5: memref<4x512xf32, #tpu.memory_space<vmem>>) attributes {dimension_semantics = [#tpu.dimension_semantics<parallel>, #tpu.dimension_semantics<parallel>], iteration_bounds = array<i64: 2, 1>, scalar_prefetch = 0 : i64, scratch_operands = 1 : i64, tpu.core_type = #tpu.core_type<tc>, window_params = [{transform_indices = @transform_0, window_bounds = array<i64: 1, 4, 256>}, {pipeline_mode = #tpu.pipeline_mode<synchronous>, transform_indices = @transform_1, window_bounds = array<i64: 9, 256>}, {transform_indices = @transform_2, window_bounds = array<i64: 1, 4, 2304>}]} {
    %cst = arith.constant 0.000000e+00 : f32
    %0 = vector.broadcast %cst : f32 to vector<4x128xf32>
    %c0 = arith.constant 0 : index
    %c0_0 = arith.constant 0 : index
    %1 = vector.load %arg5[%c0, %c0_0] : memref<4x512xf32, #tpu.memory_space<vmem>>, vector<4x128xf32>
    tpu.vector_store %arg5[%c0, %c0_0], %0 {strides = array<i32>} : memref<4x512xf32, #tpu.memory_space<vmem>>, vector<4x128xf32>,
    %c0_1 = arith.constant 0 : index
    %c384 = arith.constant 384 : index
    %2 = vector.load %arg5[%c0_1, %c384] : memref<4x512xf32, #tpu.memory_space<vmem>>, vector<4x128xf32>
    tpu.vector_store %arg5[%c0_1, %c384], %0 {strides = array<i32>} : memref<4x512xf32, #tpu.memory_space<vmem>>, vector<4x128xf32>,
    %c0_2 = arith.constant 0 : index
    %c0_3 = arith.constant 0 : index
    %c0_4 = arith.constant 0 : index
    %3 = vector.load %arg2[%c0_2, %c0_3, %c0_4] : memref<1x4x256xf32, #tpu.memory_space<vmem>>, vector<1x4x256xf32>
    %4 = vector.shape_cast %3 : vector<1x4x256xf32> to vector<4x256xf32>
    %c0_5 = arith.constant 0 : index
    %c128 = arith.constant 128 : index
    %5 = vector.load %arg5[%c0_5, %c128] : memref<4x512xf32, #tpu.memory_space<vmem>>, vector<4x256xf32>
    tpu.vector_store %arg5[%c0_5, %c128], %4 {strides = array<i32>} : memref<4x512xf32, #tpu.memory_space<vmem>>, vector<4x256xf32>,
    %c0_6 = arith.constant 0 : index
    %c111 = arith.constant 111 : index
    %6 = vector.load %arg5[%c0_6, %c111] : memref<4x512xf32, #tpu.memory_space<vmem>>, vector<4x256xf32>
    %c0_7 = arith.constant 0 : index
    %c0_8 = arith.constant 0 : index
    %7 = vector.load %arg3[%c0_7, %c0_8] : memref<9x256xi32, #tpu.memory_space<vmem>>, vector<1x256xi32>
    %c0_i32 = arith.constant 0 : i32
    %8 = vector.broadcast %c0_i32 : i32 to vector<1x256xi32>
    %9 = arith.cmpi ne, %7, %8 : vector<1x256xi32>
    %cst_9 = arith.constant 0.000000e+00 : f32
    %10 = vector.broadcast %cst_9 : f32 to vector<4x256xf32>
    %11 = vector.shape_cast %9 : vector<1x256xi1> to vector<1x256xi1>
    %12 = vector.broadcast %11 : vector<1x256xi1> to vector<4x256xi1>
    %13 = arith.select %12, %6, %10 : vector<4x256xi1>, vector<4x256xf32>
    %c0_10 = arith.constant 0 : index
    %c0_11 = arith.constant 0 : index
    %c0_12 = arith.constant 0 : index
    %14 = vector.load %arg4[%c0_10, %c0_11, %c0_12] : memref<1x4x2304xf32, #tpu.memory_space<vmem>>, vector<1x4x256xf32>
    %15 = vector.shape_cast %14 : vector<1x4x256xf32> to vector<4x256xf32>
    %16 = vector.shape_cast %13 : vector<4x256xf32> to vector<1x4x256xf32>
    tpu.vector_store %arg4[%c0_10, %c0_11, %c0_12], %16 {strides = array<i32>} : memref<1x4x2304xf32, #tpu.memory_space<vmem>>, vector<1x4x256xf32>,
    %c0_13 = arith.constant 0 : index
    %c112 = arith.constant 112 : index
    %17 = vector.load %arg5[%c0_13, %c112] : memref<4x512xf32, #tpu.memory_space<vmem>>, vector<4x256xf32>
    %c1 = arith.constant 1 : index
    %c0_14 = arith.constant 0 : index
    %18 = vector.load %arg3[%c1, %c0_14] : memref<9x256xi32, #tpu.memory_space<vmem>>, vector<1x256xi32>
    %c0_i32_15 = arith.constant 0 : i32
    %19 = vector.broadcast %c0_i32_15 : i32 to vector<1x256xi32>
    %20 = arith.cmpi ne, %18, %19 : vector<1x256xi32>
    %cst_16 = arith.constant 0.000000e+00 : f32
    %21 = vector.broadcast %cst_16 : f32 to vector<4x256xf32>
    %22 = vector.shape_cast %20 : vector<1x256xi1> to vector<1x256xi1>
    %23 = vector.broadcast %22 : vector<1x256xi1> to vector<4x256xi1>
    %24 = arith.select %23, %17, %21 : vector<4x256xi1>, vector<4x256xf32>
    %c0_17 = arith.constant 0 : index
    %c0_18 = arith.constant 0 : index
    %c256 = arith.constant 256 : index
    %25 = vector.load %arg4[%c0_17, %c0_18, %c256] : memref<1x4x2304xf32, #tpu.memory_space<vmem>>, vector<1x4x256xf32>
    %26 = vector.shape_cast %25 : vector<1x4x256xf32> to vector<4x256xf32>
    %27 = vector.shape_cast %24 : vector<4x256xf32> to vector<1x4x256xf32>
    tpu.vector_store %arg4[%c0_17, %c0_18, %c256], %27 {strides = array<i32>} : memref<1x4x2304xf32, #tpu.memory_space<vmem>>, vector<1x4x256xf32>,
    %c0_19 = arith.constant 0 : index
    %c113 = arith.constant 113 : index
    %28 = vector.load %arg5[%c0_19, %c113] : memref<4x512xf32, #tpu.memory_space<vmem>>, vector<4x256xf32>
    %c2 = arith.constant 2 : index
    %c0_20 = arith.constant 0 : index
    %29 = vector.load %arg3[%c2, %c0_20] : memref<9x256xi32, #tpu.memory_space<vmem>>, vector<1x256xi32>
    %c0_i32_21 = arith.constant 0 : i32
    %30 = vector.broadcast %c0_i32_21 : i32 to vector<1x256xi32>
    %31 = arith.cmpi ne, %29, %30 : vector<1x256xi32>
    %cst_22 = arith.constant 0.000000e+00 : f32
    %32 = vector.broadcast %cst_22 : f32 to vector<4x256xf32>
    %33 = vector.shape_cast %31 : vector<1x256xi1> to vector<1x256xi1>
    %34 = vector.broadcast %33 : vector<1x256xi1> to vector<4x256xi1>
    %35 = arith.select %34, %28, %32 : vector<4x256xi1>, vector<4x256xf32>
    %c0_23 = arith.constant 0 : index
    %c0_24 = arith.constant 0 : index
    %c512 = arith.constant 512 : index
    %36 = vector.load %arg4[%c0_23, %c0_24, %c512] : memref<1x4x2304xf32, #tpu.memory_space<vmem>>, vector<1x4x256xf32>
    %37 = vector.shape_cast %36 : vector<1x4x256xf32> to vector<4x256xf32>
    %38 = vector.shape_cast %35 : vector<4x256xf32> to vector<1x4x256xf32>
    tpu.vector_store %arg4[%c0_23, %c0_24, %c512], %38 {strides = array<i32>} : memref<1x4x2304xf32, #tpu.memory_space<vmem>>, vector<1x4x256xf32>,
    %c0_25 = arith.constant 0 : index
    %c127 = arith.constant 127 : index
    %39 = vector.load %arg5[%c0_25, %c127] : memref<4x512xf32, #tpu.memory_space<vmem>>, vector<4x256xf32>
    %c3 = arith.constant 3 : index
    %c0_26 = arith.constant 0 : index
    %40 = vector.load %arg3[%c3, %c0_26] : memref<9x256xi32, #tpu.memory_space<vmem>>, vector<1x256xi32>
    %c0_i32_27 = arith.constant 0 : i32
    %41 = vector.broadcast %c0_i32_27 : i32 to vector<1x256xi32>
    %42 = arith.cmpi ne, %40, %41 : vector<1x256xi32>
    %cst_28 = arith.constant 0.000000e+00 : f32
    %43 = vector.broadcast %cst_28 : f32 to vector<4x256xf32>
    %44 = vector.shape_cast %42 : vector<1x256xi1> to vector<1x256xi1>
    %45 = vector.broadcast %44 : vector<1x256xi1> to vector<4x256xi1>
    %46 = arith.select %45, %39, %43 : vector<4x256xi1>, vector<4x256xf32>
    %c0_29 = arith.constant 0 : index
    %c0_30 = arith.constant 0 : index
    %c768 = arith.constant 768 : index
    %47 = vector.load %arg4[%c0_29, %c0_30, %c768] : memref<1x4x2304xf32, #tpu.memory_space<vmem>>, vector<1x4x256xf32>
    %48 = vector.shape_cast %47 : vector<1x4x256xf32> to vector<4x256xf32>
    %49 = vector.shape_cast %46 : vector<4x256xf32> to vector<1x4x256xf32>
    tpu.vector_store %arg4[%c0_29, %c0_30, %c768], %49 {strides = array<i32>} : memref<1x4x2304xf32, #tpu.memory_space<vmem>>, vector<1x4x256xf32>,
    %c0_31 = arith.constant 0 : index
    %c128_32 = arith.constant 128 : index
    %50 = vector.load %arg5[%c0_31, %c128_32] : memref<4x512xf32, #tpu.memory_space<vmem>>, vector<4x256xf32>
    %c4 = arith.constant 4 : index
    %c0_33 = arith.constant 0 : index
    %51 = vector.load %arg3[%c4, %c0_33] : memref<9x256xi32, #tpu.memory_space<vmem>>, vector<1x256xi32>
    %c0_i32_34 = arith.constant 0 : i32
    %52 = vector.broadcast %c0_i32_34 : i32 to vector<1x256xi32>
    %53 = arith.cmpi ne, %51, %52 : vector<1x256xi32>
    %cst_35 = arith.constant 0.000000e+00 : f32
    %54 = vector.broadcast %cst_35 : f32 to vector<4x256xf32>
    %55 = vector.shape_cast %53 : vector<1x256xi1> to vector<1x256xi1>
    %56 = vector.broadcast %55 : vector<1x256xi1> to vector<4x256xi1>
    %57 = arith.select %56, %50, %54 : vector<4x256xi1>, vector<4x256xf32>
    %c0_36 = arith.constant 0 : index
    %c0_37 = arith.constant 0 : index
    %c1024 = arith.constant 1024 : index
    %58 = vector.load %arg4[%c0_36, %c0_37, %c1024] : memref<1x4x2304xf32, #tpu.memory_space<vmem>>, vector<1x4x256xf32>
    %59 = vector.shape_cast %58 : vector<1x4x256xf32> to vector<4x256xf32>
    %60 = vector.shape_cast %57 : vector<4x256xf32> to vector<1x4x256xf32>
    tpu.vector_store %arg4[%c0_36, %c0_37, %c1024], %60 {strides = array<i32>} : memref<1x4x2304xf32, #tpu.memory_space<vmem>>, vector<1x4x256xf32>,
    %c0_38 = arith.constant 0 : index
    %c129 = arith.constant 129 : index
    %61 = vector.load %arg5[%c0_38, %c129] : memref<4x512xf32, #tpu.memory_space<vmem>>, vector<4x256xf32>
    %c5 = arith.constant 5 : index
    %c0_39 = arith.constant 0 : index
    %62 = vector.load %arg3[%c5, %c0_39] : memref<9x256xi32, #tpu.memory_space<vmem>>, vector<1x256xi32>
    %c0_i32_40 = arith.constant 0 : i32
    %63 = vector.broadcast %c0_i32_40 : i32 to vector<1x256xi32>
    %64 = arith.cmpi ne, %62, %63 : vector<1x256xi32>
    %cst_41 = arith.constant 0.000000e+00 : f32
    %65 = vector.broadcast %cst_41 : f32 to vector<4x256xf32>
    %66 = vector.shape_cast %64 : vector<1x256xi1> to vector<1x256xi1>
    %67 = vector.broadcast %66 : vector<1x256xi1> to vector<4x256xi1>
    %68 = arith.select %67, %61, %65 : vector<4x256xi1>, vector<4x256xf32>
    %c0_42 = arith.constant 0 : index
    %c0_43 = arith.constant 0 : index
    %c1280 = arith.constant 1280 : index
    %69 = vector.load %arg4[%c0_42, %c0_43, %c1280] : memref<1x4x2304xf32, #tpu.memory_space<vmem>>, vector<1x4x256xf32>
    %70 = vector.shape_cast %69 : vector<1x4x256xf32> to vector<4x256xf32>
    %71 = vector.shape_cast %68 : vector<4x256xf32> to vector<1x4x256xf32>
    tpu.vector_store %arg4[%c0_42, %c0_43, %c1280], %71 {strides = array<i32>} : memref<1x4x2304xf32, #tpu.memory_space<vmem>>, vector<1x4x256xf32>,
    %c0_44 = arith.constant 0 : index
    %c143 = arith.constant 143 : index
    %72 = vector.load %arg5[%c0_44, %c143] : memref<4x512xf32, #tpu.memory_space<vmem>>, vector<4x256xf32>
    %c6 = arith.constant 6 : index
    %c0_45 = arith.constant 0 : index
    %73 = vector.load %arg3[%c6, %c0_45] : memref<9x256xi32, #tpu.memory_space<vmem>>, vector<1x256xi32>
    %c0_i32_46 = arith.constant 0 : i32
    %74 = vector.broadcast %c0_i32_46 : i32 to vector<1x256xi32>
    %75 = arith.cmpi ne, %73, %74 : vector<1x256xi32>
    %cst_47 = arith.constant 0.000000e+00 : f32
    %76 = vector.broadcast %cst_47 : f32 to vector<4x256xf32>
    %77 = vector.shape_cast %75 : vector<1x256xi1> to vector<1x256xi1>
    %78 = vector.broadcast %77 : vector<1x256xi1> to vector<4x256xi1>
    %79 = arith.select %78, %72, %76 : vector<4x256xi1>, vector<4x256xf32>
    %c0_48 = arith.constant 0 : index
    %c0_49 = arith.constant 0 : index
    %c1536 = arith.constant 1536 : index
    %80 = vector.load %arg4[%c0_48, %c0_49, %c1536] : memref<1x4x2304xf32, #tpu.memory_space<vmem>>, vector<1x4x256xf32>
    %81 = vector.shape_cast %80 : vector<1x4x256xf32> to vector<4x256xf32>
    %82 = vector.shape_cast %79 : vector<4x256xf32> to vector<1x4x256xf32>
    tpu.vector_store %arg4[%c0_48, %c0_49, %c1536], %82 {strides = array<i32>} : memref<1x4x2304xf32, #tpu.memory_space<vmem>>, vector<1x4x256xf32>,
    %c0_50 = arith.constant 0 : index
    %c144 = arith.constant 144 : index
    %83 = vector.load %arg5[%c0_50, %c144] : memref<4x512xf32, #tpu.memory_space<vmem>>, vector<4x256xf32>
    %c7 = arith.constant 7 : index
    %c0_51 = arith.constant 0 : index
    %84 = vector.load %arg3[%c7, %c0_51] : memref<9x256xi32, #tpu.memory_space<vmem>>, vector<1x256xi32>
    %c0_i32_52 = arith.constant 0 : i32
    %85 = vector.broadcast %c0_i32_52 : i32 to vector<1x256xi32>
    %86 = arith.cmpi ne, %84, %85 : vector<1x256xi32>
    %cst_53 = arith.constant 0.000000e+00 : f32
    %87 = vector.broadcast %cst_53 : f32 to vector<4x256xf32>
    %88 = vector.shape_cast %86 : vector<1x256xi1> to vector<1x256xi1>
    %89 = vector.broadcast %88 : vector<1x256xi1> to vector<4x256xi1>
    %90 = arith.select %89, %83, %87 : vector<4x256xi1>, vector<4x256xf32>
    %c0_54 = arith.constant 0 : index
    %c0_55 = arith.constant 0 : index
    %c1792 = arith.constant 1792 : index
    %91 = vector.load %arg4[%c0_54, %c0_55, %c1792] : memref<1x4x2304xf32, #tpu.memory_space<vmem>>, vector<1x4x256xf32>
    %92 = vector.shape_cast %91 : vector<1x4x256xf32> to vector<4x256xf32>
    %93 = vector.shape_cast %90 : vector<4x256xf32> to vector<1x4x256xf32>
    tpu.vector_store %arg4[%c0_54, %c0_55, %c1792], %93 {strides = array<i32>} : memref<1x4x2304xf32, #tpu.memory_space<vmem>>, vector<1x4x256xf32>,
    %c0_56 = arith.constant 0 : index
    %c145 = arith.constant 145 : index
    %94 = vector.load %arg5[%c0_56, %c145] : memref<4x512xf32, #tpu.memory_space<vmem>>, vector<4x256xf32>
    %c8 = arith.constant 8 : index
    %c0_57 = arith.constant 0 : index
    %95 = vector.load %arg3[%c8, %c0_57] : memref<9x256xi32, #tpu.memory_space<vmem>>, vector<1x256xi32>
    %c0_i32_58 = arith.constant 0 : i32
    %96 = vector.broadcast %c0_i32_58 : i32 to vector<1x256xi32>
    %97 = arith.cmpi ne, %95, %96 : vector<1x256xi32>
    %cst_59 = arith.constant 0.000000e+00 : f32
    %98 = vector.broadcast %cst_59 : f32 to vector<4x256xf32>
    %99 = vector.shape_cast %97 : vector<1x256xi1> to vector<1x256xi1>
    %100 = vector.broadcast %99 : vector<1x256xi1> to vector<4x256xi1>
    %101 = arith.select %100, %94, %98 : vector<4x256xi1>, vector<4x256xf32>
    %c0_60 = arith.constant 0 : index
    %c0_61 = arith.constant 0 : index
    %c2048 = arith.constant 2048 : index
    %102 = vector.load %arg4[%c0_60, %c0_61, %c2048] : memref<1x4x2304xf32, #tpu.memory_space<vmem>>, vector<1x4x256xf32>
    %103 = vector.shape_cast %102 : vector<1x4x256xf32> to vector<4x256xf32>
    %104 = vector.shape_cast %101 : vector<4x256xf32> to vector<1x4x256xf32>
    tpu.vector_store %arg4[%c0_60, %c0_61, %c2048], %104 {strides = array<i32>} : memref<1x4x2304xf32, #tpu.memory_space<vmem>>, vector<1x4x256xf32>,
    return
  }
  func.func @transform_0(%arg0: i32, %arg1: i32) -> (i32, i32, i32) {
    %c0_i32 = arith.constant 0 : i32
    %c0_i32_0 = arith.constant 0 : i32
    return %arg0, %arg1, %c0_i32 : i32, i32, i32
  }
  func.func @transform_1(%arg0: i32, %arg1: i32) -> (i32, i32) {
    %c0_i32 = arith.constant 0 : i32
    %c0_i32_0 = arith.constant 0 : i32
    %c0_i32_1 = arith.constant 0 : i32
    return %c0_i32, %c0_i32_0 : i32, i32
  }
  func.func @transform_2(%arg0: i32, %arg1: i32) -> (i32, i32, i32) {
    %c0_i32 = arith.constant 0 : i32
    %c0_i32_0 = arith.constant 0 : i32
    return %arg0, %arg1, %c0_i32 : i32, i32, i32
  }
}

</mosaic_0001>

<llo_original>
// kernel: tpu_custom_call.1
$region0: #{tpu_custom_call.1}
  #allocation0 [shape = 'u32[]', space=smem, size = 0x4, offset = 0x4, fixed_abs, tag = 'smem constant byte address 0x4 - core index']
  #allocation1 [shape = 'u32[144,128]{1,0:T(1,128)}', space=vmem, size = 0x12000, scoped, tag = 'internal scratch']
  #allocation2 [shape = 'f32[4,512]{1,0:T(4,128)}', space=vmem, size = 0x2000, scoped, tag = 'scratch operand']
  %s0 = inlined_call_operand.hbm [shape: f32[2,4,256], index: 0, kind: input, shape index: {}]
  %s1 = inlined_call_operand.hbm [shape: s32[9,256], index: 1, kind: input, shape index: {}]
  %s2 = inlined_call_operand.hbm [shape: f32[2,4,2304], index: 2, kind: output, shape index: {}]
  %s3 = sld [smem:[#allocation0]]
  $region49: #{tpu_custom_call.1} parent=0
    _
  %s5 = ssub.s32 1, %s3
  %s6 = scalar_select 0, %s5, %s3
  $region1: #{tpu_custom_call.1} parent=0
    #allocation3 [shape = 'u8[8192]{0}', space=vmem, size = 0x2000, scoped, tag = 'input window, operand 0']
    #allocation4 [shape = 's32[2]{0}', space=sflag, size = 0x8, scoped, tag = 'scoped memory for tpu_custom_call.1']
    #allocation5 [shape = 's32[2]{0}', space=sflag, size = 0x8, scoped, tag = 'scoped memory for tpu_custom_call.1']
    #allocation6 [shape = 'u8[16384]{0}', space=vmem, size = 0x4000, scoped, tag = 'input window, operand 1, single buffered']
    #allocation7 [shape = 's32[1]{0}', space=sflag, size = 0x4, scoped, tag = 'scoped memory for tpu_custom_call.1']
    #allocation8 [shape = 'u8[73728]{0}', space=vmem, size = 0x12000, scoped, tag = 'output window, operand 0']
    %7 = vsyncpa [#allocation4], 0
    %s8 = scalar_lea.sflag [#allocation4], 1
    %9 = vsyncpa %s8, 0
    %10 = vsyncpa [#allocation7], 0
    %11 = vsyncpa [#allocation5], 0
    %s12 = scalar_lea.sflag [#allocation5], 1
    %13 = vsyncpa %s12, 0
    loop: start=0, step=1, limit=4
    $region2: #{tpu_custom_call.1} parent=1 // loop_pre_header
      _
    $region3: #{tpu_custom_call.1} parent=1 // loop_header
      %s15 = sphi 0, %s19
      %p16 = scmp.ge.s32.totalorder %s15, 4
      %s22 = sphi 0, %s34
      %s23 = sphi 0, %s30
      %s24 = sphi 0, %s22
      %s25 = sphi 0, %s23
      %s26 = sphi 0, %s24
      %s27 = sphi 0, %s25
      %s39 = sphi 0, %s41
      %s42 = sphi 0, %s39
      %s43 = sphi 0, %s42
      %s59 = sphi 0, %s43
      %s63 = sphi 0, %s63
      %s65 = sphi 0, %s63
      %s66 = sphi 0, %s65
      %s80 = sphi 0, %s66
      %s88 = sphi 0, %s90
      %s91 = sphi 0, %s88
      %s92 = sphi 0, %s91
      %s108 = sphi 0, %s92
    $region4: #{tpu_custom_call.1} parent=1 // loop_header_branch
      %18 = sbr.rel (%p16) target = $region8
    $region5: #{tpu_custom_call.1} parent=1 // loop_body
      %s20 = ssub.s32 %s15, 1
      %s21 = ssub.s32 %s15, 2
      %s28 = sadd.s32 1, %s23
      %p29 = scmp.ge.s32.totalorder %s28, 1
      %s30 = scalar_select %p29, 0, %s28
      %s31 = sadd.s32 1, %s22
      %s32 = scalar_select %p29, %s31, %s22
      %p33 = scmp.ge.s32.totalorder %s32, 2
      %s34 = scalar_select %p33, 0, %s32
      %s35 = ssub.s32 %s22, %s34
      %s36 = ssub.s32 %s23, %s30
      %s37 = sor.u32 %s35, %s36
      %p38 = scmp.eq.s32.totalorder %s37, 0
      %s40 = sadd.s32 %s39, 1
      %s41 = scalar_select %p38, %s39, %s40
      %p44 = pneg %p38
      %p45 = scmp.eq.s32.totalorder %s15, 1
      %p46 = por %p44, %p45
      %p47 = scmp.ne.s32.totalorder %s39, %s42
      %p48 = scmp.eq.s32.totalorder %s15, 0
      %p49 = por %p47, %p48
      %p50 = scmp.ne.s32.totalorder %s39, %s42
      %p51 = scmp.eq.s32.totalorder %s20, 1
      %p52 = por %p50, %p51
      %p53 = scmp.ne.s32.totalorder %s42, %s43
      %p54 = scmp.eq.s32.totalorder %s20, 0
      %p55 = por %p53, %p54
      %p56 = scmp.ne.s32.totalorder %s42, %s43
      %p57 = scmp.eq.s32.totalorder %s21, 1
      %p58 = por %p56, %p57
      %p60 = scmp.ne.s32.totalorder %s43, %s59
      %p61 = scmp.eq.s32.totalorder %s21, 0
      %p62 = por %p60, %p61
      %s64 = sadd.s32 %s63, 1
      %p67 = scmp.eq.s32.totalorder %s15, 1
      %p68 = scmp.ne.s32.totalorder %s63, %s65
      %p69 = scmp.eq.s32.totalorder %s15, 0
      %p70 = por %p68, %p69
      %p71 = scmp.ne.s32.totalorder %s63, %s65
      %p72 = scmp.eq.s32.totalorder %s20, 1
      %p73 = por %p71, %p72
      %p74 = scmp.ne.s32.totalorder %s65, %s66
      %p75 = scmp.eq.s32.totalorder %s20, 0
      %p76 = por %p74, %p75
      %p77 = scmp.ne.s32.totalorder %s65, %s66
      %p78 = scmp.eq.s32.totalorder %s21, 1
      %p79 = por %p77, %p78
      %p81 = scmp.ne.s32.totalorder %s66, %s80
      %p82 = scmp.eq.s32.totalorder %s21, 0
      %p83 = por %p81, %p82
      %s84 = ssub.s32 %s22, %s34
      %s85 = ssub.s32 %s23, %s30
      %s86 = sor.u32 %s84, %s85
      %p87 = scmp.eq.s32.totalorder %s86, 0
      %s89 = sadd.s32 %s88, 1
      %s90 = scalar_select %p87, %s88, %s89
      %p93 = pneg %p87
      %p94 = scmp.eq.s32.totalorder %s15, 1
      %p95 = por %p93, %p94
      %p96 = scmp.ne.s32.totalorder %s88, %s91
      %p97 = scmp.eq.s32.totalorder %s15, 0
      %p98 = por %p96, %p97
      %p99 = scmp.ne.s32.totalorder %s88, %s91
      %p100 = scmp.eq.s32.totalorder %s20, 1
      %p101 = por %p99, %p100
      %p102 = scmp.ne.s32.totalorder %s91, %s92
      %p103 = scmp.eq.s32.totalorder %s20, 0
      %p104 = por %p102, %p103
      %p105 = scmp.ne.s32.totalorder %s91, %s92
      %p106 = scmp.eq.s32.totalorder %s21, 1
      %p107 = por %p105, %p106
      %p109 = scmp.ne.s32.totalorder %s92, %s108
      %p110 = scmp.eq.s32.totalorder %s21, 0
      %p111 = por %p109, %p110
      %p112 = scmp.le.s32.totalorder 1, %s15
      %p113 = scmp.lt.s32.totalorder %s15, 3
      %p114 = pnand %p112, %p113
      %p115 = pneg %p114
      // Predicated region
      $region9: #{tpu_custom_call.1} parent=5 // pred_check
        _
      $region10: #{tpu_custom_call.1} parent=5 // pred_check_branch
        %117 = sbr.rel (%p114) target = $region12
      $region11: #{tpu_custom_call.1} parent=5 // pred_region
        %s118 = ssub.s32 %s15, 1
        // Predicated region
        $region13: #{tpu_custom_call.1} parent=11 // pred_check
          %p119 = pneg %p76
        $region14: #{tpu_custom_call.1} parent=11 // pred_check_branch
          %121 = sbr.rel (%p119) target = $region16
        $region15: #{tpu_custom_call.1} parent=11 // pred_region
          %s123 = ssub.s32 512, 512
          %124 = vsyncadd [#allocation7], %s123
          %s125 = sshll.u32 [#allocation6], 4
          %s126 = int_to_ptr.vmem [resolvable:$true] %s125
          %131 = dma.hbm_to_vmem [thread:$0]  %s1, 512, %s126, [#allocation7], 256, 256, 16
        $region16: #{tpu_custom_call.1} parent=11 // pred_fallthru
          _
      $region12: #{tpu_custom_call.1} parent=5 // pred_fallthru
        _
      %p132 = scmp.lt.s32.totalorder %s15, 2
      // Predicated region
      $region17: #{tpu_custom_call.1} parent=5 // pred_check
        %p133 = pneg %p132
      $region18: #{tpu_custom_call.1} parent=5 // pred_check_branch
        %135 = sbr.rel (%p133) target = $region20
      $region19: #{tpu_custom_call.1} parent=5 // pred_region
        // Predicated region
        $region21: #{tpu_custom_call.1} parent=19 // pred_check
          %p136 = pneg %p49
        $region22: #{tpu_custom_call.1} parent=19 // pred_check_branch
          %138 = sbr.rel (%p136) target = $region24
        $region23: #{tpu_custom_call.1} parent=19 // pred_region
          %s139 = sand.u32 %s39, 1
          %s140 = scalar_lea.sflag [#allocation4], %s139
          %s141 = sand.u32 %s39, 1
          %s142 = smul.addr %s141, 8
          %s143 = scalar_lea.vmem [#allocation3], %s142
          %s145 = ssub.s32 128, 128
          %146 = vsyncadd %s140, %s145
          %s147 = smul.addr %s23, 2
          %s148 = smul.addr %s22, 2
          %s149 = sadd.s32 %s147, %s148
          %s150 = smul.addr %s149, 64
          %s151 = scalar_lea.hbm %s0, %s150
          %s153 = sshll.u32 %s143, 4
          %s154 = int_to_ptr.vmem [resolvable:$true] %s153
          %156 = dma.hbm_to_vmem [thread:$0]  %s151, 128, %s154, %s140
        $region24: #{tpu_custom_call.1} parent=19 // pred_fallthru
          _
      $region20: #{tpu_custom_call.1} parent=5 // pred_fallthru
        _
      %p157 = scmp.le.s32.totalorder 1, %s15
      %p158 = scmp.lt.s32.totalorder %s15, 3
      %p159 = pnand %p157, %p158
      %p160 = pneg %p159
      // Predicated region
      $region25: #{tpu_custom_call.1} parent=5 // pred_check
        _
      $region26: #{tpu_custom_call.1} parent=5 // pred_check_branch
        %162 = sbr.rel (%p159) target = $region28
      $region27: #{tpu_custom_call.1} parent=5 // pred_region
        %s163 = ssub.s32 %s15, 1
        %s164 = sand.u32 %s42, 1
        %s165 = scalar_lea.sflag [#allocation4], %s164
        %s166 = sand.u32 %s42, 1
        %s167 = smul.addr %s166, 8
        %s168 = scalar_lea.vmem [#allocation3], %s167
        // Predicated region
        $region29: #{tpu_custom_call.1} parent=27 // pred_check
          %p169 = pneg %p55
        $region30: #{tpu_custom_call.1} parent=27 // pred_check_branch
          %171 = sbr.rel (%p169) target = $region32
        $region31: #{tpu_custom_call.1} parent=27 // pred_region
          %172 = dma.done %s165, 128
        $region32: #{tpu_custom_call.1} parent=27 // pred_fallthru
          _
        // Predicated region
        $region33: #{tpu_custom_call.1} parent=27 // pred_check
          %p173 = pneg %p76
        $region34: #{tpu_custom_call.1} parent=27 // pred_check_branch
          %175 = sbr.rel (%p173) target = $region36
        $region35: #{tpu_custom_call.1} parent=27 // pred_region
          %176 = dma.done [#allocation7], 512
        $region36: #{tpu_custom_call.1} parent=27 // pred_fallthru
          _
        %s177 = sand.u32 %s42, 1
        %s178 = scalar_lea.sflag [#allocation4], %s177
        %s179 = sand.u32 %s42, 1
        %s180 = smul.addr %s179, 8
        %s181 = scalar_lea.vmem [#allocation3], %s180
        %p182 = pneg %p55
        %p183 = pneg %p52
        %p184 = pneg %p76
        %p185 = pneg %p73
        %p186 = pneg %p104
        %p187 = pneg %p101
        %s188 = sand.u32 %s91, 1
        %s189 = scalar_lea.sflag [#allocation5], %s188
        %s190 = sand.u32 %s91, 1
        %s191 = smul.addr %s190, 72
        %s192 = scalar_lea.vmem [#allocation8], %s191
        %193 = vst [vmem:[#allocation2] sm:$0xf] 0.0
        %194 = vst [vmem:[#allocation2 + $0xc] sm:$0xf] 0.0
        %v195 = vld [vmem:[%s168] sm:$0xff]
        %196 = vst [vmem:[#allocation2 + $0x4] sm:$0xff] %v195
        %v197 = vld [vmem:[#allocation2] sm:$0xff]
        %v198 = vld [vmem:[#allocation2 + $0x8] sm:$0xf]
        %v199 = vld [vmem:[#allocation6] ss:$8 sm:$0x3]
        %vm200 = vcmp.ne.s32.totalorder %v199, 0
        %v201 = vsel %vm200, 1, 0
        %v202 = vlaneseq
        %v203 = vshrl.u32 %v202, 7
        %v204 = vsub.s32 0, %v203
        %v205 = vrot.slane %v201, %v204
        %v206 = vlaneseq
        %v207 = vshrl.u32 %v206, 7
        %v208 = vsub.s32 1, %v207
        %v209 = vrot.slane %v201, %v208
        %vm210 = vcmp.eq.s32.totalorder %v205, 1
        %vm211 = vcmp.eq.s32.totalorder %v209, 1
        %v214 = vcombine.high %v197, %v197
        %215 = vrot.lane.b32.xlu0 %v197, 17
        %v216 = vpop.permute.xlu0 %215
        %217 = vrot.lane.b32.xlu0 %v214, 17
        %v218 = vpop.permute.xlu0 %217
        %219 = vrot.lane.b32.xlu0 %v198, 17
        %v220 = vpop.permute.xlu0 %219
        %vm221 = vcmask 138240
        %v222 = vsel %vm221, %v216, %v218
        %v223 = vsel %vm221, %v218, %v220
        %v226 = vsel %vm210, %v222, 0.0
        %v227 = vsel %vm211, %v223, 0.0
        %v230 = vcombine.low %v226, %v227
        %232 = vst [vmem:[%s192] sm:$0xff] %v230
        %v233 = vld [vmem:[#allocation2] sm:$0xff]
        %v234 = vld [vmem:[#allocation2 + $0x8] sm:$0xf]
        %s235 = scalar_lea.vmem [#allocation6], 1
        %v236 = vld [vmem:[%s235] ss:$8 sm:$0x3]
        %vm237 = vcmp.ne.s32.totalorder %v236, 0
        %v238 = vsel %vm237, 1, 0
        %v239 = vlaneseq
        %v240 = vshrl.u32 %v239, 7
        %v241 = vsub.s32 0, %v240
        %v242 = vrot.slane %v238, %v241
        %v243 = vlaneseq
        %v244 = vshrl.u32 %v243, 7
        %v245 = vsub.s32 1, %v244
        %v246 = vrot.slane %v238, %v245
        %vm247 = vcmp.eq.s32.totalorder %v242, 1
        %vm248 = vcmp.eq.s32.totalorder %v246, 1
        %v251 = vcombine.high %v233, %v233
        %252 = vrot.lane.b32.xlu0 %v233, 16
        %v253 = vpop.permute.xlu0 %252
        %254 = vrot.lane.b32.xlu0 %v251, 16
        %v255 = vpop.permute.xlu0 %254
        %256 = vrot.lane.b32.xlu0 %v234, 16
        %v257 = vpop.permute.xlu0 %256
        %vm258 = vcmask 130048
        %v259 = vsel %vm258, %v253, %v255
        %v260 = vsel %vm258, %v255, %v257
        %v263 = vsel %vm247, %v259, 0.0
        %v264 = vsel %vm248, %v260, 0.0
        %v267 = vcombine.low %v263, %v264
        %269 = vst [vmem:[%s192 + $0x8] sm:$0xff] %v267
        %v270 = vld [vmem:[#allocation2] sm:$0xff]
        %v271 = vld [vmem:[#allocation2 + $0x8] sm:$0xf]
        %s272 = scalar_lea.vmem [#allocation6], 2
        %v273 = vld [vmem:[%s272] ss:$8 sm:$0x3]
        %vm274 = vcmp.ne.s32.totalorder %v273, 0
        %v275 = vsel %vm274, 1, 0
        %v276 = vlaneseq
        %v277 = vshrl.u32 %v276, 7
        %v278 = vsub.s32 0, %v277
        %v279 = vrot.slane %v275, %v278
        %v280 = vlaneseq
        %v281 = vshrl.u32 %v280, 7
        %v282 = vsub.s32 1, %v281
        %v283 = vrot.slane %v275, %v282
        %vm284 = vcmp.eq.s32.totalorder %v279, 1
        %vm285 = vcmp.eq.s32.totalorder %v283, 1
        %v288 = vcombine.high %v270, %v270
        %289 = vrot.lane.b32.xlu0 %v270, 15
        %v290 = vpop.permute.xlu0 %289
        %291 = vrot.lane.b32.xlu0 %v288, 15
        %v292 = vpop.permute.xlu0 %291
        %293 = vrot.lane.b32.xlu0 %v271, 15
        %v294 = vpop.permute.xlu0 %293
        %vm295 = vcmask 121856
        %v296 = vsel %vm295, %v290, %v292
        %v297 = vsel %vm295, %v292, %v294
        %v300 = vsel %vm284, %v296, 0.0
        %v301 = vsel %vm285, %v297, 0.0
        %v304 = vcombine.low %v300, %v301
        %306 = vst [vmem:[%s192 + $0x10] sm:$0xff] %v304
        %v307 = vld [vmem:[#allocation2] sm:$0xff]
        %v308 = vld [vmem:[#allocation2 + $0x8] sm:$0xf]
        %s309 = scalar_lea.vmem [#allocation6], 3
        %v310 = vld [vmem:[%s309] ss:$8 sm:$0x3]
        %vm311 = vcmp.ne.s32.totalorder %v310, 0
        %v312 = vsel %vm311, 1, 0
        %v313 = vlaneseq
        %v314 = vshrl.u32 %v313, 7
        %v315 = vsub.s32 0, %v314
        %v316 = vrot.slane %v312, %v315
        %v317 = vlaneseq
        %v318 = vshrl.u32 %v317, 7
        %v319 = vsub.s32 1, %v318
        %v320 = vrot.slane %v312, %v319
        %vm321 = vcmp.eq.s32.totalorder %v316, 1
        %vm322 = vcmp.eq.s32.totalorder %v320, 1
        %v325 = vcombine.high %v307, %v307
        %326 = vrot.lane.b32.xlu0 %v307, 1
        %v327 = vpop.permute.xlu0 %326
        %328 = vrot.lane.b32.xlu0 %v325, 1
        %v329 = vpop.permute.xlu0 %328
        %330 = vrot.lane.b32.xlu0 %v308, 1
        %v331 = vpop.permute.xlu0 %330
        %vm332 = vcmask 7168
        %v333 = vsel %vm332, %v327, %v329
        %v334 = vsel %vm332, %v329, %v331
        %v337 = vsel %vm321, %v333, 0.0
        %v338 = vsel %vm322, %v334, 0.0
        %v341 = vcombine.low %v337, %v338
        %343 = vst [vmem:[%s192 + $0x18] sm:$0xff] %v341
        %v344 = vld [vmem:[#allocation2 + $0x4] sm:$0xff]
        %s345 = scalar_lea.vmem [#allocation6], 4
        %v346 = vld [vmem:[%s345] ss:$8 sm:$0x3]
        %vm347 = vcmp.ne.s32.totalorder %v346, 0
        %v348 = vsel %vm347, 1, 0
        %v349 = vlaneseq
        %v350 = vshrl.u32 %v349, 7
        %v351 = vsub.s32 0, %v350
        %v352 = vrot.slane %v348, %v351
        %v353 = vlaneseq
        %v354 = vshrl.u32 %v353, 7
        %v355 = vsub.s32 1, %v354
        %v356 = vrot.slane %v348, %v355
        %vm357 = vcmp.eq.s32.totalorder %v352, 1
        %vm358 = vcmp.eq.s32.totalorder %v356, 1
        %v360 = vcombine.high %v344, %v344
        %v362 = vsel %vm357, %v344, 0.0
        %v363 = vsel %vm358, %v360, 0.0
        %v366 = vcombine.low %v362, %v363
        %368 = vst [vmem:[%s192 + $0x20] sm:$0xff] %v366
        %v369 = vld [vmem:[#allocation2 + $0x4] sm:$0xff]
        %v370 = vld [vmem:[#allocation2 + $0xc] sm:$0xf]
        %s371 = scalar_lea.vmem [#allocation6], 5
        %v372 = vld [vmem:[%s371] ss:$8 sm:$0x3]
        %vm373 = vcmp.ne.s32.totalorder %v372, 0
        %v374 = vsel %vm373, 1, 0
        %v375 = vlaneseq
        %v376 = vshrl.u32 %v375, 7
        %v377 = vsub.s32 0, %v376
        %v378 = vrot.slane %v374, %v377
        %v379 = vlaneseq
        %v380 = vshrl.u32 %v379, 7
        %v381 = vsub.s32 1, %v380
        %v382 = vrot.slane %v374, %v381
        %vm383 = vcmp.eq.s32.totalorder %v378, 1
        %vm384 = vcmp.eq.s32.totalorder %v382, 1
        %v387 = vcombine.high %v369, %v369
        %388 = vrot.lane.b32.xlu0 %v369, 127
        %v389 = vpop.permute.xlu0 %388
        %390 = vrot.lane.b32.xlu0 %v387, 127
        %v391 = vpop.permute.xlu0 %390
        %392 = vrot.lane.b32.xlu0 %v370, 127
        %v393 = vpop.permute.xlu0 %392
        %vm394 = vcmask 1039360
        %v395 = vsel %vm394, %v389, %v391
        %v396 = vsel %vm394, %v391, %v393
        %v399 = vsel %vm383, %v395, 0.0
        %v400 = vsel %vm384, %v396, 0.0
        %v403 = vcombine.low %v399, %v400
        %405 = vst [vmem:[%s192 + $0x28] sm:$0xff] %v403
        %v406 = vld [vmem:[#allocation2 + $0x4] sm:$0xff]
        %v407 = vld [vmem:[#allocation2 + $0xc] sm:$0xf]
        %s408 = scalar_lea.vmem [#allocation6], 6
        %v409 = vld [vmem:[%s408] ss:$8 sm:$0x3]
        %vm410 = vcmp.ne.s32.totalorder %v409, 0
        %v411 = vsel %vm410, 1, 0
        %v412 = vlaneseq
        %v413 = vshrl.u32 %v412, 7
        %v414 = vsub.s32 0, %v413
        %v415 = vrot.slane %v411, %v414
        %v416 = vlaneseq
        %v417 = vshrl.u32 %v416, 7
        %v418 = vsub.s32 1, %v417
        %v419 = vrot.slane %v411, %v418
        %vm420 = vcmp.eq.s32.totalorder %v415, 1
        %vm421 = vcmp.eq.s32.totalorder %v419, 1
        %v424 = vcombine.high %v406, %v406
        %425 = vrot.lane.b32.xlu0 %v406, 113
        %v426 = vpop.permute.xlu0 %425
        %427 = vrot.lane.b32.xlu0 %v424, 113
        %v428 = vpop.permute.xlu0 %427
        %429 = vrot.lane.b32.xlu0 %v407, 113
        %v430 = vpop.permute.xlu0 %429
        %vm431 = vcmask 924672
        %v432 = vsel %vm431, %v426, %v428
        %v433 = vsel %vm431, %v428, %v430
        %v436 = vsel %vm420, %v432, 0.0
        %v437 = vsel %vm421, %v433, 0.0
        %v440 = vcombine.low %v436, %v437
        %442 = vst [vmem:[%s192 + $0x30] sm:$0xff] %v440
        %v443 = vld [vmem:[#allocation2 + $0x4] sm:$0xff]
        %v444 = vld [vmem:[#allocation2 + $0xc] sm:$0xf]
        %s445 = scalar_lea.vmem [#allocation6], 7
        %v446 = vld [vmem:[%s445] ss:$8 sm:$0x3]
        %vm447 = vcmp.ne.s32.totalorder %v446, 0
        %v448 = vsel %vm447, 1, 0
        %v449 = vlaneseq
        %v450 = vshrl.u32 %v449, 7
        %v451 = vsub.s32 0, %v450
        %v452 = vrot.slane %v448, %v451
        %v453 = vlaneseq
        %v454 = vshrl.u32 %v453, 7
        %v455 = vsub.s32 1, %v454
        %v456 = vrot.slane %v448, %v455
        %vm457 = vcmp.eq.s32.totalorder %v452, 1
        %vm458 = vcmp.eq.s32.totalorder %v456, 1
        %v461 = vcombine.high %v443, %v443
        %462 = vrot.lane.b32.xlu0 %v443, 112
        %v463 = vpop.permute.xlu0 %462
        %464 = vrot.lane.b32.xlu0 %v461, 112
        %v465 = vpop.permute.xlu0 %464
        %466 = vrot.lane.b32.xlu0 %v444, 112
        %v467 = vpop.permute.xlu0 %466
        %vm468 = vcmask 916480
        %v469 = vsel %vm468, %v463, %v465
        %v470 = vsel %vm468, %v465, %v467
        %v473 = vsel %vm457, %v469, 0.0
        %v474 = vsel %vm458, %v470, 0.0
        %v477 = vcombine.low %v473, %v474
        %479 = vst [vmem:[%s192 + $0x38] sm:$0xff] %v477
        %v480 = vld [vmem:[#allocation2 + $0x4] sm:$0xff]
        %v481 = vld [vmem:[#allocation2 + $0xc] sm:$0xf]
        %s482 = scalar_lea.vmem [#allocation6], 16
        %v483 = vld [vmem:[%s482] ss:$8 sm:$0x3]
        %vm484 = vcmp.ne.s32.totalorder %v483, 0
        %v485 = vsel %vm484, 1, 0
        %v486 = vlaneseq
        %v487 = vshrl.u32 %v486, 7
        %v488 = vsub.s32 0, %v487
        %v489 = vrot.slane %v485, %v488
        %v490 = vlaneseq
        %v491 = vshrl.u32 %v490, 7
        %v492 = vsub.s32 1, %v491
        %v493 = vrot.slane %v485, %v492
        %vm494 = vcmp.eq.s32.totalorder %v489, 1
        %vm495 = vcmp.eq.s32.totalorder %v493, 1
        %v498 = vcombine.high %v480, %v480
        %499 = vrot.lane.b32.xlu0 %v480, 111
        %v500 = vpop.permute.xlu0 %499
        %501 = vrot.lane.b32.xlu0 %v498, 111
        %v502 = vpop.permute.xlu0 %501
        %503 = vrot.lane.b32.xlu0 %v481, 111
        %v504 = vpop.permute.xlu0 %503
        %vm505 = vcmask 908288
        %v506 = vsel %vm505, %v500, %v502
        %v507 = vsel %vm505, %v502, %v504
        %v510 = vsel %vm494, %v506, 0.0
        %v511 = vsel %vm495, %v507, 0.0
        %v514 = vcombine.low %v510, %v511
        %516 = vst [vmem:[%s192 + $0x40] sm:$0xff] %v514
        %s517 = sand.u32 %s91, 1
        %s518 = scalar_lea.sflag [#allocation5], %s517
        %s519 = sand.u32 %s91, 1
        %s520 = smul.addr %s519, 72
        %s521 = scalar_lea.vmem [#allocation8], %s520
        // Predicated region
        $region37: #{tpu_custom_call.1} parent=27 // pred_check
          %p522 = pneg %p101
        $region38: #{tpu_custom_call.1} parent=27 // pred_check_branch
          %524 = sbr.rel (%p522) target = $region40
        $region39: #{tpu_custom_call.1} parent=27 // pred_region
          %s526 = ssub.s32 1152, 1152
          %527 = vsyncadd %s518, %s526
          %s528 = smul.addr %s25, 18
          %s529 = smul.addr %s24, 18
          %s530 = sadd.s32 %s528, %s529
          %s531 = smul.addr %s530, 64
          %s532 = scalar_lea.hbm %s2, %s531
          %s534 = sshll.u32 %s521, 4
          %s535 = int_to_ptr.vmem [resolvable:$true] %s534
          %537 = dma.vmem_to_hbm [thread:$0]  %s535, 1152, %s532, %s518
        $region40: #{tpu_custom_call.1} parent=27 // pred_fallthru
          _
      $region28: #{tpu_custom_call.1} parent=5 // pred_fallthru
        _
      %p538 = scmp.le.s32.totalorder 2, %s15
      // Predicated region
      $region41: #{tpu_custom_call.1} parent=5 // pred_check
        %p539 = pneg %p538
      $region42: #{tpu_custom_call.1} parent=5 // pred_check_branch
        %541 = sbr.rel (%p539) target = $region44
      $region43: #{tpu_custom_call.1} parent=5 // pred_region
        %s542 = ssub.s32 %s15, 2
        // Predicated region
        $region45: #{tpu_custom_call.1} parent=43 // pred_check
          %p543 = pneg %p107
        $region46: #{tpu_custom_call.1} parent=43 // pred_check_branch
          %545 = sbr.rel (%p543) target = $region48
        $region47: #{tpu_custom_call.1} parent=43 // pred_region
          %s546 = sand.u32 %s92, 1
          %s547 = scalar_lea.sflag [#allocation5], %s546
          %s548 = sand.u32 %s92, 1
          %s549 = smul.addr %s548, 72
          %s550 = scalar_lea.vmem [#allocation8], %s549
          %551 = dma.done %s547, 1152
        $region48: #{tpu_custom_call.1} parent=43 // pred_fallthru
          _
      $region44: #{tpu_custom_call.1} parent=5 // pred_fallthru
        _
    $region6: #{tpu_custom_call.1} parent=1 // loop_footer
      %s19 = sadd.s32 1, %s15
    $region7: #{tpu_custom_call.1} parent=1 // loop_footer_branch
      %14 = sbr.rel target = $region3
    $region8: #{tpu_custom_call.1} parent=1 // loop_exit
      _
    %552 = vsyncpa [#allocation4], 1
    %s553 = scalar_lea.sflag [#allocation4], 1
    %554 = vsyncpa %s553, 1
    %555 = vsyncpa [#allocation7], 1
    %556 = vsyncpa [#allocation5], 1
    %s557 = scalar_lea.sflag [#allocation5], 1
    %558 = vsyncpa %s557, 1

</llo_original>
